<compile_context>
chip_gen: v7x
topology: tpu7x:2x2x1
jax: 0.10.0
libtpu: 0.0.40
codegen_flags: <defaults>
</compile_context>

<pallas_src>
import functools

import jax
import jax.numpy as jnp
from jax.experimental import pallas as pl
from jax.experimental.pallas import tpu as pltpu


def _round_up(x: int, m: int) -> int:
    return ((x + m - 1) // m) * m


def _prototypes_kernel(x_ref, w_ref, o_ref, acc_ref):
    # Zero the resident f32 accumulator at the first K step.
    @pl.when(pl.program_id(2) == 0)
    def _():
        acc_ref[...] = jnp.zeros_like(acc_ref)

    # x tile: (tm, tk), w tile: (tn, tk)  — contract the shared D (=k) axis.
    # This is exactly y = x @ W^T without ever materializing W^T in HBM.
    acc_ref[...] += jax.lax.dot_general(
        x_ref[...],
        w_ref[...],
        dimension_numbers=(((1,), (1,)), ((), ())),
        preferred_element_type=jnp.float32,
    )

    # Single lane-dense writeback per (i, j) output tile at the last K step.
    @pl.when(pl.program_id(2) == pl.num_programs(2) - 1)
    def _():
        o_ref[...] = acc_ref[...].astype(o_ref.dtype)


@functools.partial(jax.jit, static_argnames=("tm", "tn", "tk"))
def prototypes_forward(x, weight, *, tm=256, tn=256, tk=512):
    """Forward of Prototypes: x (B, D), weight (P, D) -> (B, P) = x @ W^T."""
    B, D = x.shape
    P, D2 = weight.shape
    assert D == D2, "feature dims must match"

    # Clamp tiles to the padded problem size (keeps tiny problems a single
    # grid step) while staying (8, 128)-aligned / lane-dense.
    tm = min(tm, _round_up(B, 8))
    tn = min(tn, _round_up(P, 128))
    tk = min(tk, _round_up(D, 128))

    Bp = _round_up(B, tm)
    Pp = _round_up(P, tn)
    Dp = _round_up(D, tk)

    # Zero-pad once; padded rows/cols contribute zeros and are sliced off.
    xp = x if (Bp == B and Dp == D) else jnp.pad(x, ((0, Bp - B), (0, Dp - D)))
    wp = (
        weight
        if (Pp == P and Dp == D)
        else jnp.pad(weight, ((0, Pp - P), (0, Dp - D)))
    )

    grid = (Bp // tm, Pp // tn, Dp // tk)

    out = pl.pallas_call(
        _prototypes_kernel,
        out_shape=jax.ShapeDtypeStruct((Bp, Pp), x.dtype),
        grid_spec=pltpu.PrefetchScalarGridSpec(
            num_scalar_prefetch=0,
            grid=grid,
            in_specs=[
                # x tile, indexed by (batch block i, reduction block k)
                pl.BlockSpec((tm, tk), lambda i, j, k: (i, k)),
                # W tile in native (P, D) layout, indexed by (proto block j, k)
                pl.BlockSpec((tn, tk), lambda i, j, k: (j, k)),
            ],
            # Output tile is resident across the K axis (accumulator pattern).
            out_specs=pl.BlockSpec((tm, tn), lambda i, j, k: (i, j)),
            scratch_shapes=[pltpu.VMEM((tm, tn), jnp.float32)],
        ),
        compiler_params=pltpu.CompilerParams(
            dimension_semantics=("parallel", "parallel", "arbitrary"),
            vmem_limit_bytes=32 * 1024 * 1024,
        ),
    )(xp, wp)

    return out[:B, :P]


def normalize_prototypes(weight):
    """Equivalent of Prototypes.normalize_prototypes (plain-JAX glue):
    L2-normalize each prototype row (dim=1, p=2 in PyTorch)."""
    norm = jnp.sqrt(jnp.sum(weight * weight, axis=1, keepdims=True))
    return weight / jnp.maximum(norm, 1e-12)


if __name__ == "__main__":
    # Small shapes consistent with the module: output_dim=32, num_prototypes=16.
    B, output_dim, num_prototypes = 8, 32, 16

    key = jax.random.PRNGKey(0)
    kx, kw = jax.random.split(key)

    # Deterministic "init" of the Linear weight (P, D), as in
    # nn.Linear(output_dim, num_prototypes, bias=False).
    x = jax.random.normal(kx, (B, output_dim), dtype=jnp.float32)
    weight = jax.random.normal(
        kw, (num_prototypes, output_dim), dtype=jnp.float32
    ) * 0.1
    weight = normalize_prototypes(weight)

    out = prototypes_forward(x, weight)
    out = jax.block_until_ready(out)

    # Reference check in plain JAX.
    ref = x @ weight.T
    assert out.shape == (B, num_prototypes)
    assert jnp.allclose(out, ref, atol=1e-5, rtol=1e-5)

    print("KERNEL_OK")
</pallas_src>

<mosaic_0001>
module attributes {stable_mosaic.version = 11 : i64} {
  func.func @_prototypes_kernel(%arg0: i32, %arg1: i32, %arg2: i32, %arg3: memref<8x128xf32, #tpu.memory_space<vmem>>, %arg4: memref<128x128xf32, #tpu.memory_space<vmem>>, %arg5: memref<8x128xf32, #tpu.memory_space<vmem>>, %arg6: memref<8x128xf32, #tpu.memory_space<vmem>>) attributes {dimension_semantics = [#tpu.dimension_semantics<parallel>, #tpu.dimension_semantics<parallel>, #tpu.dimension_semantics<arbitrary>], iteration_bounds = array<i64: 1, 1, 1>, scalar_prefetch = 0 : i64, scratch_operands = 1 : i64, tpu.core_type = #tpu.core_type<tc>, window_params = [{transform_indices = @transform_0, window_bounds = array<i64: 8, 128>}, {transform_indices = @transform_1, window_bounds = array<i64: 128, 128>}, {transform_indices = @transform_2, window_bounds = array<i64: 8, 128>}]} {
    %c0_i32 = arith.constant 0 : i32
    %0 = arith.cmpi eq, %arg2, %c0_i32 : i32
    %1 = arith.extui %0 : i1 to i32
    %c0_i32_0 = arith.constant 0 : i32
    %2 = arith.cmpi ne, %1, %c0_i32_0 : i32
    scf.if %2 {
      %cst_10 = arith.constant 0.000000e+00 : f32
      %12 = vector.broadcast %cst_10 : f32 to vector<8x128xf32>
      %c0_11 = arith.constant 0 : index
      %c0_12 = arith.constant 0 : index
      %13 = vector.load %arg6[%c0_11, %c0_12] : memref<8x128xf32, #tpu.memory_space<vmem>>, vector<8x128xf32>
      tpu.vector_store %arg6[%c0_11, %c0_12], %12 {strides = array<i32>} : memref<8x128xf32, #tpu.memory_space<vmem>>, vector<8x128xf32>,
    } else {
    }
    %c0 = arith.constant 0 : index
    %c0_1 = arith.constant 0 : index
    %3 = vector.load %arg6[%c0, %c0_1] : memref<8x128xf32, #tpu.memory_space<vmem>>, vector<8x128xf32>
    %c0_2 = arith.constant 0 : index
    %c0_3 = arith.constant 0 : index
    %4 = vector.load %arg3[%c0_2, %c0_3] : memref<8x128xf32, #tpu.memory_space<vmem>>, vector<8x128xf32>
    %c0_4 = arith.constant 0 : index
    %c0_5 = arith.constant 0 : index
    %5 = vector.load %arg4[%c0_4, %c0_5] : memref<128x128xf32, #tpu.memory_space<vmem>>, vector<128x128xf32>
    %cst = arith.constant dense<0.000000e+00> : vector<8x128xf32>
    %6 = tpu.matmul %4, %5, %cst {dimension_numbers = #tpu.dot_dimension_numbers<[1], [1], [0], [0], [0, 0, 1, 0], [], []>} : vector<8x128xf32>, vector<128x128xf32>, vector<8x128xf32> -> vector<8x128xf32>
    %7 = arith.addf %3, %6 : vector<8x128xf32>
    %c0_6 = arith.constant 0 : index
    %c0_7 = arith.constant 0 : index
    %8 = vector.load %arg6[%c0_6, %c0_7] : memref<8x128xf32, #tpu.memory_space<vmem>>, vector<8x128xf32>
    tpu.vector_store %arg6[%c0_6, %c0_7], %7 {strides = array<i32>} : memref<8x128xf32, #tpu.memory_space<vmem>>, vector<8x128xf32>,
    %c0_i32_8 = arith.constant 0 : i32
    %9 = arith.cmpi eq, %arg2, %c0_i32_8 : i32
    %10 = arith.extui %9 : i1 to i32
    %c0_i32_9 = arith.constant 0 : i32
    %11 = arith.cmpi ne, %10, %c0_i32_9 : i32
    scf.if %11 {
      %c0_10 = arith.constant 0 : index
      %c0_11 = arith.constant 0 : index
      %12 = vector.load %arg6[%c0_10, %c0_11] : memref<8x128xf32, #tpu.memory_space<vmem>>, vector<8x128xf32>
      %c0_12 = arith.constant 0 : index
      %c0_13 = arith.constant 0 : index
      %13 = vector.load %arg5[%c0_12, %c0_13] : memref<8x128xf32, #tpu.memory_space<vmem>>, vector<8x128xf32>
      tpu.vector_store %arg5[%c0_12, %c0_13], %12 {strides = array<i32>} : memref<8x128xf32, #tpu.memory_space<vmem>>, vector<8x128xf32>,
    } else {
    }
    return
  }
  func.func @transform_0(%arg0: i32, %arg1: i32, %arg2: i32) -> (i32, i32) {
    %c0_i32 = arith.constant 0 : i32
    return %arg0, %arg2 : i32, i32
  }
  func.func @transform_1(%arg0: i32, %arg1: i32, %arg2: i32) -> (i32, i32) {
    %c0_i32 = arith.constant 0 : i32
    return %arg1, %arg2 : i32, i32
  }
  func.func @transform_2(%arg0: i32, %arg1: i32, %arg2: i32) -> (i32, i32) {
    %c0_i32 = arith.constant 0 : i32
    return %arg0, %arg1 : i32, i32
  }
}

</mosaic_0001>

<llo_original>
// kernel: prototypes_forward.1
$region0: #{prototypes_forward.1}
  #allocation0 [shape = 'u32[]', space=smem, size = 0x4, offset = 0x4, fixed_abs, tag = 'smem constant byte address 0x4 - core index']
  #allocation1 [shape = 'u32[144,128]{1,0:T(1,128)}', space=vmem, size = 0x12000, scoped, tag = 'internal scratch']
  #allocation2 [shape = 'f32[8,128]{1,0:T(8,128)}', space=vmem, size = 0x1000, scoped, tag = 'scratch operand']
  %s0 = inlined_call_operand.vmem [shape: f32[8,128], index: 0, kind: input, shape index: {}]
  %s1 = inlined_call_operand.vmem [shape: f32[128,128], index: 1, kind: input, shape index: {}]
  %s2 = inlined_call_operand.hbm [shape: f32[8,128], index: 2, kind: output, shape index: {}]
  %s3 = sld [smem:[#allocation0]]
  $region26: #{prototypes_forward.1} parent=0
    _
  %s5 = ssub.s32 1, %s3
  %s6 = scalar_select 0, %s5, %s3
  $region1: #{prototypes_forward.1} parent=0
    #allocation3 [shape = 'u8[4096]{0}', space=vmem, size = 0x1000, scoped, tag = 'output window, operand 0, single buffered']
    #allocation4 [shape = 's32[1]{0}', space=sflag, size = 0x4, scoped, tag = 'scoped memory for prototypes_forward.1']
    %7 = vsyncpa [#allocation4], 0
    // Predicated region
    $region2: #{prototypes_forward.1} parent=1 // pred_check
      _
    $region3: #{prototypes_forward.1} parent=1 // pred_check_branch
      %9 = sbr.rel (0) target = $region5
    $region4: #{prototypes_forward.1} parent=1 // pred_region
      _
    $region5: #{prototypes_forward.1} parent=1 // pred_fallthru
      _
    // Predicated region
    $region6: #{prototypes_forward.1} parent=1 // pred_check
      _
    $region7: #{prototypes_forward.1} parent=1 // pred_check_branch
      %11 = sbr.rel (0) target = $region9
    $region8: #{prototypes_forward.1} parent=1 // pred_region
      _
    $region9: #{prototypes_forward.1} parent=1 // pred_fallthru
      _
    %p12 = scmp.eq.s32.totalorder 0, 0
    // Predicated region
    $region10: #{prototypes_forward.1} parent=1 // pred_check
      %p13 = pneg %p12
    $region11: #{prototypes_forward.1} parent=1 // pred_check_branch
      %15 = sbr.rel (%p13) target = $region13
    $region12: #{prototypes_forward.1} parent=1 // pred_region
      %16 = vst [vmem:[#allocation2] sm:$0xff] 0.0
    $region13: #{prototypes_forward.1} parent=1 // pred_fallthru
      _
    %v17 = vld [vmem:[#allocation2] sm:$0xff]
    %v18 = vld [vmem:[%s0] sm:$0xff]
    %v19 = vld [vmem:[%s1] sm:$0xff]
    %v20 = vld [vmem:[%s1 + $0x8] sm:$0xff]
    %v21 = vld [vmem:[%s1 + $0x10] sm:$0xff]
    %v22 = vld [vmem:[%s1 + $0x18] sm:$0xff]
    %v23 = vld [vmem:[%s1 + $0x20] sm:$0xff]
    %v24 = vld [vmem:[%s1 + $0x28] sm:$0xff]
    %v25 = vld [vmem:[%s1 + $0x30] sm:$0xff]
    %v26 = vld [vmem:[%s1 + $0x38] sm:$0xff]
    %v27 = vld [vmem:[%s1 + $0x40] sm:$0xff]
    %v28 = vld [vmem:[%s1 + $0x48] sm:$0xff]
    %v29 = vld [vmem:[%s1 + $0x50] sm:$0xff]
    %v30 = vld [vmem:[%s1 + $0x58] sm:$0xff]
    %v31 = vld [vmem:[%s1 + $0x60] sm:$0xff]
    %v32 = vld [vmem:[%s1 + $0x68] sm:$0xff]
    %v33 = vld [vmem:[%s1 + $0x70] sm:$0xff]
    %v34 = vld [vmem:[%s1 + $0x78] sm:$0xff]
    %35 = vmatprep.subr.mxu0 0.0
    %36 = vmatpush1.xpose.msra.mxu0 %v19
    %37 = vmatprep.subr.mxu0 0.0
    %38 = vmatpush1.xpose.msra.mxu0 %v20
    %39 = vmatprep.subr.mxu0 0.0
    %40 = vmatpush1.xpose.msra.mxu0 %v21
    %41 = vmatprep.subr.mxu0 0.0
    %42 = vmatpush1.xpose.msra.mxu0 %v22
    %43 = vmatprep.subr.mxu0 0.0
    %44 = vmatpush1.xpose.msra.mxu0 %v23
    %45 = vmatprep.subr.mxu0 0.0
    %46 = vmatpush1.xpose.msra.mxu0 %v24
    %47 = vmatprep.subr.mxu0 0.0
    %48 = vmatpush1.xpose.msra.mxu0 %v25
    %49 = vmatprep.subr.mxu0 0.0
    %50 = vmatpush1.xpose.msra.mxu0 %v26
    %51 = vmatprep.subr.mxu0 0.0
    %52 = vmatpush1.xpose.msra.mxu0 %v27
    %53 = vmatprep.subr.mxu0 0.0
    %54 = vmatpush1.xpose.msra.mxu0 %v28
    %55 = vmatprep.subr.mxu0 0.0
    %56 = vmatpush1.xpose.msra.mxu0 %v29
    %57 = vmatprep.subr.mxu0 0.0
    %58 = vmatpush1.xpose.msra.mxu0 %v30
    %59 = vmatprep.subr.mxu0 0.0
    %60 = vmatpush1.xpose.msra.mxu0 %v31
    %61 = vmatprep.subr.mxu0 0.0
    %62 = vmatpush1.xpose.msra.mxu0 %v32
    %63 = vmatprep.subr.mxu0 0.0
    %64 = vmatpush1.xpose.msra.mxu0 %v33
    %65 = vmatprep.subr.mxu0 0.0
    %66 = vmatpush1.xpose.msra.mxu0 %v34
    %67 = vmatprep.subr.mxu0 0.0
    %68 = vmatpush1.xpose.msra.mxu0 0.0
    %69 = vmatprep.subr.mxu0 0.0
    %70 = vmatpush1.xpose.msra.mxu0 0.0
    %71 = vmatprep.subr.mxu0 0.0
    %72 = vmatpush1.xpose.msra.mxu0 0.0
    %73 = vmatprep.subr.mxu0 0.0
    %74 = vmatpush1.xpose.msra.mxu0 0.0
    %75 = vmatprep.subr.mxu0 0.0
    %76 = vmatpush1.xpose.msra.mxu0 0.0
    %77 = vmatprep.subr.mxu0 0.0
    %78 = vmatpush1.xpose.msra.mxu0 0.0
    %79 = vmatprep.subr.mxu0 0.0
    %80 = vmatpush1.xpose.msra.mxu0 0.0
    %81 = vmatprep.subr.mxu0 0.0
    %82 = vmatpush1.xpose.msra.mxu0 0.0
    %83 = vmatprep.subr.mxu0 0.0
    %84 = vmatpush1.xpose.msra.mxu0 0.0
    %85 = vmatprep.subr.mxu0 0.0
    %86 = vmatpush1.xpose.msra.mxu0 0.0
    %87 = vmatprep.subr.mxu0 0.0
    %88 = vmatpush1.xpose.msra.mxu0 0.0
    %89 = vmatprep.subr.mxu0 0.0
    %90 = vmatpush1.xpose.msra.mxu0 0.0
    %91 = vmatprep.subr.mxu0 0.0
    %92 = vmatpush1.xpose.msra.mxu0 0.0
    %93 = vmatprep.subr.mxu0 0.0
    %94 = vmatpush1.xpose.msra.mxu0 0.0
    %95 = vmatprep.subr.mxu0 0.0
    %96 = vmatpush1.xpose.msra.mxu0 0.0
    %97 = vmatprep.subr.mxu0 0.0
    %98 = vmatpush1.xpose.msra.mxu0 0.0
    %99 = vmatprep.mubr.f32.mxu0 0.0
    %100 = vmatmul.mubr.f32.gmra.mrb[0].mxu0 %v18
    %v101 = vpop.f32.mrb[0].mxu0
    %v102 = vadd.f32 0.0, %v101
    %v103 = vpop.f32.mrb[0].mxu0
    %104 = vdwg.mxu0
    %v105 = vadd.f32 %v17, %v102
    %106 = vst [vmem:[#allocation2] sm:$0xff] %v105
    // Predicated region
    $region14: #{prototypes_forward.1} parent=1 // pred_check
      %p107 = pneg %p12
    $region15: #{prototypes_forward.1} parent=1 // pred_check_branch
      %109 = sbr.rel (%p107) target = $region17
    $region16: #{prototypes_forward.1} parent=1 // pred_region
      %v110 = vld [vmem:[#allocation2] sm:$0xff]
      %111 = vst [vmem:[#allocation3] sm:$0xff] %v110
    $region17: #{prototypes_forward.1} parent=1 // pred_fallthru
      _
    // Predicated region
    $region18: #{prototypes_forward.1} parent=1 // pred_check
      _
    $region19: #{prototypes_forward.1} parent=1 // pred_check_branch
      %113 = sbr.rel (0) target = $region21
    $region20: #{prototypes_forward.1} parent=1 // pred_region
      %s115 = ssub.s32 128, 128
      %116 = vsyncadd [#allocation4], %s115
      %s118 = sshll.u32 [#allocation3], 4
      %s119 = int_to_ptr.vmem [resolvable:$true] %s118
      %121 = dma.vmem_to_hbm [thread:$0]  %s119, 128, %s2, [#allocation4]
    $region21: #{prototypes_forward.1} parent=1 // pred_fallthru
      _
    // Predicated region
    $region22: #{prototypes_forward.1} parent=1 // pred_check
      _
    $region23: #{prototypes_forward.1} parent=1 // pred_check_branch
      %123 = sbr.rel (0) target = $region25
    $region24: #{prototypes_forward.1} parent=1 // pred_region
      %124 = dma.done [#allocation4], 128
    $region25: #{prototypes_forward.1} parent=1 // pred_fallthru
      _
    %125 = vsyncpa [#allocation4], 1

</llo_original>
